<compile_context>
chip_gen: v7x
topology: tpu7x:2x2x1
jax: 0.10.0
libtpu: 0.0.40
codegen_flags: <defaults>
</compile_context>

<pallas_src>
import jax
import jax.numpy as jnp
from jax.experimental import pallas as pl
from jax.experimental.pallas import tpu as pltpu

_INV_SQRT2 = 0.7071067811865476  # 1 / sqrt(2)


def _gelu_kernel(x_ref, o_ref):
    x = x_ref[...].astype(jnp.float32)
    # Exact GELU: 0.5 * x * (1 + erf(x / sqrt(2))) -- matches F.gelu default.
    y = 0.5 * x * (1.0 + jax.lax.erf(x * _INV_SQRT2))
    o_ref[...] = y.astype(o_ref.dtype)


def _sublane_multiple(itemsize):
    # 8 rows/sublane-group for 32-bit, 16 for 16-bit, 32 for 8-bit dtypes.
    return max(8, 8 * (4 // itemsize))


def _pick_lane(n, sub, lane_cap):
    """Largest multiple of 128 (<= lane_cap) dividing n; 0 if none exists."""
    start = min(lane_cap, n) // 128 * 128
    # First pass: also require at least one full sublane group of rows.
    for cand in range(start, 0, -128):
        if n % cand == 0 and n // cand >= sub:
            return cand
    # Second pass: any divisor (tiny inputs end up as a single full-array block).
    for cand in range(start, 0, -128):
        if n % cand == 0:
            return cand
    return 0


def gelu(x, *, lane_cap=1024, target_block_bytes=4 * 1024 * 1024,
         min_pallas_elements=64 * 1024):
    """Elementwise exact GELU via Pallas. Works for any shape/dtype."""
    orig_shape = x.shape
    dtype = x.dtype
    n = x.size
    if n == 0:
        return x
    if n < min_pallas_elements:
        # Tiny tensors: XLA fused elementwise beats pallas_call dispatch cost.
        return jax.nn.gelu(x, approximate=False).astype(dtype)

    itemsize = jnp.dtype(dtype).itemsize
    sub = _sublane_multiple(itemsize)

    lane = _pick_lane(n, sub, lane_cap)
    padded = lane == 0
    if padded:
        lane = 512  # no 128-multiple divides n; fall back to the pad path.

    rows = pl.cdiv(n, lane)

    # Rows per block targeting ~target_block_bytes, sublane-aligned.
    tile_rows = max(sub, (target_block_bytes // (lane * itemsize)) // sub * sub)
    if tile_rows >= rows:
        # Whole array fits in one block.  Split it in two (sublane-aligned) when
        # possible so both v7x TensorCores get a grid step; otherwise use a
        # single full-array block (valid: block shape == full array dims).
        half = (rows // 2) // sub * sub
        tile_rows = half if half >= sub else rows

    x_flat = x.reshape(-1)
    n_total = rows * lane
    if n_total != n:
        # GELU(0) == 0, so zero padding is safe; the tail is sliced off below.
        x_flat = jnp.pad(x_flat, (0, n_total - n))
    x2d = x_flat.reshape(rows, lane)

    grid = (pl.cdiv(rows, tile_rows),)  # ragged last block is fine (elementwise)

    out = pl.pallas_call(
        _gelu_kernel,
        out_shape=jax.ShapeDtypeStruct((rows, lane), dtype),
        grid_spec=pl.GridSpec(
            grid=grid,
            in_specs=[pl.BlockSpec((tile_rows, lane), lambda i: (i, 0))],
            out_specs=pl.BlockSpec((tile_rows, lane), lambda i: (i, 0)),
        ),
        compiler_params=pltpu.CompilerParams(
            dimension_semantics=("parallel",),
            vmem_limit_bytes=32 * 1024 * 1024,
        ),
        cost_estimate=pl.CostEstimate(
            flops=25 * n,            # erf rational polynomial ~20-30 flops/elem
            transcendentals=n,
            bytes_accessed=2 * n * itemsize,
        ),
    )(x2d)

    if n_total == n:
        # No padding happened: reshape is pure metadata, no extra HBM pass.
        return out.reshape(orig_shape)
    return out.reshape(-1)[:n].reshape(orig_shape)


if __name__ == "__main__":
    key = jax.random.PRNGKey(0)
    # NCHW input, consistent with typical PyTorch usage.
    x = jax.random.normal(key, (2, 4, 16, 16), dtype=jnp.float32)
    ref = jax.nn.gelu(x, approximate=False)

    # Force the Pallas path (this input is below the small-input threshold)
    # so the kernel itself is exercised and checked.
    y = gelu(x, min_pallas_elements=0)
    y = jax.block_until_ready(y)
    assert y.shape == x.shape and y.dtype == x.dtype
    assert jnp.allclose(y, ref, atol=1e-6, rtol=1e-6)

    # Default path (small-input fast path) must agree too.
    y2 = jax.block_until_ready(gelu(x))
    assert y2.shape == x.shape and y2.dtype == x.dtype
    assert jnp.allclose(y2, ref, atol=1e-6, rtol=1e-6)

    print("KERNEL_OK")
</pallas_src>

<mosaic_0001>
module attributes {stable_mosaic.version = 11 : i64} {
  func.func @_gelu_kernel(%arg0: i32, %arg1: memref<8x256xf32, #tpu.memory_space<vmem>>, %arg2: memref<8x256xf32, #tpu.memory_space<vmem>>) attributes {dimension_semantics = [#tpu.dimension_semantics<parallel>], iteration_bounds = array<i64: 1>, scalar_prefetch = 0 : i64, scratch_operands = 0 : i64, tpu.core_type = #tpu.core_type<tc>, window_params = [{transform_indices = @transform_0, window_bounds = array<i64: 8, 256>}, {transform_indices = @transform_1, window_bounds = array<i64: 8, 256>}]} {
    %c0 = arith.constant 0 : index
    %c0_0 = arith.constant 0 : index
    %0 = vector.load %arg1[%c0, %c0_0] : memref<8x256xf32, #tpu.memory_space<vmem>>, vector<8x256xf32>
    %cst = arith.constant 5.000000e-01 : f32
    %1 = vector.broadcast %cst : f32 to vector<8x256xf32>
    %2 = arith.mulf %1, %0 : vector<8x256xf32>
    %cst_1 = arith.constant 0.707106769 : f32
    %3 = vector.broadcast %cst_1 : f32 to vector<8x256xf32>
    %4 = arith.mulf %0, %3 : vector<8x256xf32>
    %5 = math.erf %4 : vector<8x256xf32>
    %cst_2 = arith.constant 1.000000e+00 : f32
    %6 = vector.broadcast %cst_2 : f32 to vector<8x256xf32>
    %7 = arith.addf %6, %5 : vector<8x256xf32>
    %8 = arith.mulf %2, %7 : vector<8x256xf32>
    %c0_3 = arith.constant 0 : index
    %c0_4 = arith.constant 0 : index
    %9 = vector.load %arg2[%c0_3, %c0_4] : memref<8x256xf32, #tpu.memory_space<vmem>>, vector<8x256xf32>
    tpu.vector_store %arg2[%c0_3, %c0_4], %8 {strides = array<i32>} : memref<8x256xf32, #tpu.memory_space<vmem>>, vector<8x256xf32>,
    return
  }
  func.func @transform_0(%arg0: i32) -> (i32, i32) {
    %c0_i32 = arith.constant 0 : i32
    %c0_i32_0 = arith.constant 0 : i32
    return %arg0, %c0_i32 : i32, i32
  }
  func.func @transform_1(%arg0: i32) -> (i32, i32) {
    %c0_i32 = arith.constant 0 : i32
    %c0_i32_0 = arith.constant 0 : i32
    return %arg0, %c0_i32 : i32, i32
  }
}

</mosaic_0001>

<llo_original>
// kernel: tpu_custom_call.1
$region0: #{tpu_custom_call.1}
  #allocation0 [shape = 'u32[]', space=smem, size = 0x4, offset = 0x4, fixed_abs, tag = 'smem constant byte address 0x4 - core index']
  #allocation1 [shape = 'u32[144,128]{1,0:T(1,128)}', space=vmem, size = 0x12000, scoped, tag = 'internal scratch']
  %s0 = inlined_call_operand.hbm [shape: f32[8,256], index: 0, kind: input, shape index: {}]
  %s1 = inlined_call_operand.hbm [shape: f32[8,256], index: 1, kind: output, shape index: {}]
  %s2 = sld [smem:[#allocation0]]
  $region18: #{tpu_custom_call.1} parent=0
    _
  %s4 = ssub.s32 1, %s2
  %s5 = scalar_select 0, %s4, %s2
  $region1: #{tpu_custom_call.1} parent=0
    #allocation2 [shape = 'u8[8192]{0}', space=vmem, size = 0x2000, scoped, tag = 'input window, operand 0, single buffered']
    #allocation3 [shape = 's32[1]{0}', space=sflag, size = 0x4, scoped, tag = 'scoped memory for tpu_custom_call.1']
    #allocation4 [shape = 's32[1]{0}', space=sflag, size = 0x4, scoped, tag = 'scoped memory for tpu_custom_call.1']
    #allocation5 [shape = 'u8[8192]{0}', space=vmem, size = 0x2000, scoped, tag = 'output window, operand 0, single buffered']
    %6 = vsyncpa [#allocation3], 0
    %7 = vsyncpa [#allocation4], 0
    // Predicated region
    $region2: #{tpu_custom_call.1} parent=1 // pred_check
      _
    $region3: #{tpu_custom_call.1} parent=1 // pred_check_branch
      %9 = sbr.rel (0) target = $region5
    $region4: #{tpu_custom_call.1} parent=1 // pred_region
      %s11 = ssub.s32 256, 256
      %12 = vsyncadd [#allocation3], %s11
      %s14 = sshll.u32 [#allocation2], 4
      %s15 = int_to_ptr.vmem [resolvable:$true] %s14
      %17 = dma.hbm_to_vmem [thread:$0]  %s0, 256, %s15, [#allocation3]
    $region5: #{tpu_custom_call.1} parent=1 // pred_fallthru
      _
    // Predicated region
    $region6: #{tpu_custom_call.1} parent=1 // pred_check
      _
    $region7: #{tpu_custom_call.1} parent=1 // pred_check_branch
      %19 = sbr.rel (0) target = $region9
    $region8: #{tpu_custom_call.1} parent=1 // pred_region
      %20 = dma.done [#allocation3], 256
    $region9: #{tpu_custom_call.1} parent=1 // pred_fallthru
      _
    %v21 = vld [vmem:[#allocation2] sm:$0xff]
    %v22 = vld [vmem:[#allocation2 + $0x8] sm:$0xff]
    %v23 = vmul.f32 %v21, 0.5
    %v24 = vmul.f32 %v22, 0.5
    %v25 = vmul.f32 %v21, 0.70710677
    %v26 = vmul.f32 %v22, 0.70710677
    %v27 = verf.f32.pop %v25
    %v28 = verf.f32.pop %v26
    %v29 = vadd.f32 %v27, 1.0
    %v30 = vadd.f32 %v28, 1.0
    %v31 = vmul.f32 %v23, %v29
    %v32 = vmul.f32 %v24, %v30
    %33 = vst [vmem:[#allocation5] sm:$0xff] %v31
    %34 = vst [vmem:[#allocation5 + $0x8] sm:$0xff] %v32
    // Predicated region
    $region10: #{tpu_custom_call.1} parent=1 // pred_check
      _
    $region11: #{tpu_custom_call.1} parent=1 // pred_check_branch
      %36 = sbr.rel (0) target = $region13
    $region12: #{tpu_custom_call.1} parent=1 // pred_region
      %s38 = ssub.s32 256, 256
      %39 = vsyncadd [#allocation4], %s38
      %s41 = sshll.u32 [#allocation5], 4
      %s42 = int_to_ptr.vmem [resolvable:$true] %s41
      %44 = dma.vmem_to_hbm [thread:$0]  %s42, 256, %s1, [#allocation4]
    $region13: #{tpu_custom_call.1} parent=1 // pred_fallthru
      _
    // Predicated region
    $region14: #{tpu_custom_call.1} parent=1 // pred_check
      _
    $region15: #{tpu_custom_call.1} parent=1 // pred_check_branch
      %46 = sbr.rel (0) target = $region17
    $region16: #{tpu_custom_call.1} parent=1 // pred_region
      %47 = dma.done [#allocation4], 256
    $region17: #{tpu_custom_call.1} parent=1 // pred_fallthru
      _
    %48 = vsyncpa [#allocation3], 1
    %49 = vsyncpa [#allocation4], 1

</llo_original>
